<compile_context>
chip_gen: v7x
topology: tpu7x:2x2x1
jax: 0.10.0
libtpu: 0.0.40
codegen_flags: <defaults>
</compile_context>

<pallas_src>
import functools

import jax
import jax.numpy as jnp
from jax.experimental import pallas as pl
from jax.experimental.pallas import tpu as pltpu

_LANES = 128
_SUBLANE_PACK = 16          # multiple of 8 (f32) and 16 (bf16 packing)
_MAX_TILE_ROWS = 4096       # (4096, 128) f32 tile = 2 MiB -> fits VMEM on v5e/v6e/v7x


def _dropout_kernel(x_ref, bits_ref, o_ref, *, threshold: int, scale: float):
    # Bernoulli(keep_prob) via integer threshold on raw uint32 bits.
    keep = bits_ref[...] < jnp.uint32(threshold)
    # Compute scale/select in f32, cast once at the store.
    x_f32 = x_ref[...].astype(jnp.float32)
    o_ref[...] = jnp.where(keep, x_f32 * jnp.float32(scale),
                           jnp.float32(0.0)).astype(o_ref.dtype)


def my_dropout(x: jax.Array, p: float = 0.5, seed: int = 0) -> jax.Array:
    """Pallas TPU implementation of MyDropout.forward (inverted dropout)."""
    if p < 0.0 or p > 1.0:
        raise ValueError(
            "dropout probability has to be between 0 and 1, but got {}".format(p)
        )
    if p == 0.0:
        # keep_prob == 1: identity, skip the HBM read+write pass entirely.
        return x
    if p == 1.0:
        # keep_prob == 0: everything dropped (limit behavior of the mask).
        return jnp.zeros_like(x)

    keep_prob = 1.0 - p
    scale = 1.0 / keep_prob
    # uint32 threshold: P(bits < threshold) == keep_prob.
    threshold = min(int(round(keep_prob * 4294967296.0)), 4294967295)

    orig_shape = x.shape
    total = x.size

    # Flatten and pad up to a multiple of (16 sublanes x 128 lanes).
    chunk = _SUBLANE_PACK * _LANES
    padded_total = ((total + chunk - 1) // chunk) * chunk
    x_flat = x.reshape(-1)
    if padded_total != total:
        x_flat = jnp.pad(x_flat, (0, padded_total - total))

    rows = padded_total // _LANES
    x2d = x_flat.reshape(rows, _LANES)

    # Random bits for the whole (padded) slab — deterministic in `seed`, and
    # independent per element, so no per-tile seed correlation issues.
    bits = jax.random.bits(jax.random.PRNGKey(seed), (rows, _LANES),
                           dtype=jnp.uint32)

    # Row tiling: biggest tile up to ~2 MiB (f32); sublane-aligned by
    # construction (rows is a multiple of 16). Ragged last block (if any) is
    # padded/masked by Pallas.
    tr = min(rows, _MAX_TILE_ROWS)
    grid = (pl.cdiv(rows, tr),)

    kernel = functools.partial(_dropout_kernel, threshold=threshold, scale=scale)

    out2d = pl.pallas_call(
        kernel,
        out_shape=jax.ShapeDtypeStruct((rows, _LANES), x.dtype),
        grid=grid,
        in_specs=[
            pl.BlockSpec((tr, _LANES), lambda i: (i, 0)),   # x tile
            pl.BlockSpec((tr, _LANES), lambda i: (i, 0)),   # random bits tile
        ],
        out_specs=pl.BlockSpec((tr, _LANES), lambda i: (i, 0)),
        compiler_params=pltpu.CompilerParams(
            dimension_semantics=("parallel",)),
    )(x2d, bits)

    return out2d.reshape(-1)[:total].reshape(orig_shape)


if __name__ == "__main__":
    key = jax.random.PRNGKey(0)
    # Small NCHW-style input, consistent with a conv-net activation tensor.
    x = jax.random.normal(key, (2, 4, 16, 16), dtype=jnp.float32)

    y = my_dropout(x, p=0.5, seed=0)
    y = jax.block_until_ready(y)

    # Shape/dtype preserved.
    assert y.shape == x.shape and y.dtype == x.dtype

    # Surviving elements must equal x * 1/(1-p) = 2.0 * x; dropped ones are 0.
    nonzero = y != 0
    assert bool(jnp.allclose(jnp.where(nonzero, y, 0.0),
                             jnp.where(nonzero, x * 2.0, 0.0),
                             atol=1e-5, rtol=1e-5))

    # Drop rate should be roughly p = 0.5.
    drop_frac = float(jnp.mean((y == 0).astype(jnp.float32)))
    assert 0.3 < drop_frac < 0.7

    # p == 0 path: identity.
    y0 = jax.block_until_ready(my_dropout(x, p=0.0, seed=0))
    assert bool(jnp.allclose(y0, x))

    print("KERNEL_OK")
</pallas_src>

<mosaic_0001>
module attributes {stable_mosaic.version = 11 : i64} {
  func.func @_dropout_kernel(%arg0: i32, %arg1: memref<16x128xf32, #tpu.memory_space<vmem>>, %arg2: memref<16x128xi32, #tpu.memory_space<vmem>>, %arg3: memref<16x128xf32, #tpu.memory_space<vmem>>) attributes {dimension_semantics = [#tpu.dimension_semantics<parallel>], iteration_bounds = array<i64: 1>, scalar_prefetch = 0 : i64, scratch_operands = 0 : i64, tpu.core_type = #tpu.core_type<tc>, window_params = [{transform_indices = @transform_0, window_bounds = array<i64: 16, 128>}, {transform_indices = @transform_1, window_bounds = array<i64: 16, 128>}, {transform_indices = @transform_2, window_bounds = array<i64: 16, 128>}]} {
    %c0 = arith.constant 0 : index
    %c0_0 = arith.constant 0 : index
    %0 = vector.load %arg2[%c0, %c0_0] : memref<16x128xi32, #tpu.memory_space<vmem>>, vector<16x128xi32>
    %c-2147483648_i32 = arith.constant -2147483648 : i32
    %1 = vector.broadcast %c-2147483648_i32 : i32 to vector<16x128xi32>
    %2 = arith.cmpi ult, %0, %1 : vector<16x128xi32>
    %c0_1 = arith.constant 0 : index
    %c0_2 = arith.constant 0 : index
    %3 = vector.load %arg1[%c0_1, %c0_2] : memref<16x128xf32, #tpu.memory_space<vmem>>, vector<16x128xf32>
    %cst = arith.constant 2.000000e+00 : f32
    %4 = vector.broadcast %cst : f32 to vector<16x128xf32>
    %5 = arith.mulf %3, %4 : vector<16x128xf32>
    %cst_3 = arith.constant 0.000000e+00 : f32
    %6 = vector.broadcast %cst_3 : f32 to vector<16x128xf32>
    %7 = arith.select %2, %5, %6 : vector<16x128xi1>, vector<16x128xf32>
    %c0_4 = arith.constant 0 : index
    %c0_5 = arith.constant 0 : index
    %8 = vector.load %arg3[%c0_4, %c0_5] : memref<16x128xf32, #tpu.memory_space<vmem>>, vector<16x128xf32>
    tpu.vector_store %arg3[%c0_4, %c0_5], %7 {strides = array<i32>} : memref<16x128xf32, #tpu.memory_space<vmem>>, vector<16x128xf32>,
    return
  }
  func.func @transform_0(%arg0: i32) -> (i32, i32) {
    %c0_i32 = arith.constant 0 : i32
    %c0_i32_0 = arith.constant 0 : i32
    return %arg0, %c0_i32 : i32, i32
  }
  func.func @transform_1(%arg0: i32) -> (i32, i32) {
    %c0_i32 = arith.constant 0 : i32
    %c0_i32_0 = arith.constant 0 : i32
    return %arg0, %c0_i32 : i32, i32
  }
  func.func @transform_2(%arg0: i32) -> (i32, i32) {
    %c0_i32 = arith.constant 0 : i32
    %c0_i32_0 = arith.constant 0 : i32
    return %arg0, %c0_i32 : i32, i32
  }
}

</mosaic_0001>

<llo_original>
// kernel: tpu_custom_call.1
$region0: #{tpu_custom_call.1}
  #allocation0 [shape = 'u32[]', space=smem, size = 0x4, offset = 0x4, fixed_abs, tag = 'smem constant byte address 0x4 - core index']
  #allocation1 [shape = 'u32[144,128]{1,0:T(1,128)}', space=vmem, size = 0x12000, scoped, tag = 'internal scratch']
  %s0 = inlined_call_operand.hbm [shape: f32[16,128], index: 0, kind: input, shape index: {}]
  %s1 = inlined_call_operand.hbm [shape: u32[16,128], index: 1, kind: input, shape index: {}]
  %s2 = inlined_call_operand.hbm [shape: f32[16,128], index: 2, kind: output, shape index: {}]
  %s3 = sld [smem:[#allocation0]]
  $region26: #{tpu_custom_call.1} parent=0
    _
  %s5 = ssub.s32 1, %s3
  %s6 = scalar_select 0, %s5, %s3
  $region1: #{tpu_custom_call.1} parent=0
    #allocation2 [shape = 'u8[8192]{0}', space=vmem, size = 0x2000, scoped, tag = 'input window, operand 0, single buffered']
    #allocation3 [shape = 's32[1]{0}', space=sflag, size = 0x4, scoped, tag = 'scoped memory for tpu_custom_call.1']
    #allocation4 [shape = 's32[1]{0}', space=sflag, size = 0x4, scoped, tag = 'scoped memory for tpu_custom_call.1']
    #allocation5 [shape = 'u8[8192]{0}', space=vmem, size = 0x2000, scoped, tag = 'input window, operand 1, single buffered']
    #allocation6 [shape = 's32[1]{0}', space=sflag, size = 0x4, scoped, tag = 'scoped memory for tpu_custom_call.1']
    #allocation7 [shape = 'u8[8192]{0}', space=vmem, size = 0x2000, scoped, tag = 'output window, operand 0, single buffered']
    %7 = vsyncpa [#allocation3], 0
    %8 = vsyncpa [#allocation6], 0
    %9 = vsyncpa [#allocation4], 0
    // Predicated region
    $region2: #{tpu_custom_call.1} parent=1 // pred_check
      _
    $region3: #{tpu_custom_call.1} parent=1 // pred_check_branch
      %11 = sbr.rel (0) target = $region5
    $region4: #{tpu_custom_call.1} parent=1 // pred_region
      %s13 = ssub.s32 256, 256
      %14 = vsyncadd [#allocation3], %s13
      %s15 = sshll.u32 [#allocation2], 4
      %s16 = int_to_ptr.vmem [resolvable:$true] %s15
      %21 = dma.hbm_to_vmem [thread:$0]  %s0, 256, %s16, [#allocation3], 128, 128, 8
    $region5: #{tpu_custom_call.1} parent=1 // pred_fallthru
      _
    // Predicated region
    $region6: #{tpu_custom_call.1} parent=1 // pred_check
      _
    $region7: #{tpu_custom_call.1} parent=1 // pred_check_branch
      %23 = sbr.rel (0) target = $region9
    $region8: #{tpu_custom_call.1} parent=1 // pred_region
      %s25 = ssub.s32 256, 256
      %26 = vsyncadd [#allocation6], %s25
      %s27 = sshll.u32 [#allocation5], 4
      %s28 = int_to_ptr.vmem [resolvable:$true] %s27
      %33 = dma.hbm_to_vmem [thread:$0]  %s1, 256, %s28, [#allocation6], 128, 128, 8
    $region9: #{tpu_custom_call.1} parent=1 // pred_fallthru
      _
    // Predicated region
    $region10: #{tpu_custom_call.1} parent=1 // pred_check
      _
    $region11: #{tpu_custom_call.1} parent=1 // pred_check_branch
      %35 = sbr.rel (0) target = $region13
    $region12: #{tpu_custom_call.1} parent=1 // pred_region
      %36 = dma.done [#allocation3], 256
    $region13: #{tpu_custom_call.1} parent=1 // pred_fallthru
      _
    // Predicated region
    $region14: #{tpu_custom_call.1} parent=1 // pred_check
      _
    $region15: #{tpu_custom_call.1} parent=1 // pred_check_branch
      %38 = sbr.rel (0) target = $region17
    $region16: #{tpu_custom_call.1} parent=1 // pred_region
      %39 = dma.done [#allocation6], 256
    $region17: #{tpu_custom_call.1} parent=1 // pred_fallthru
      _
    %v40 = vld [vmem:[#allocation5] sm:$0xff]
    %v41 = vld [vmem:[#allocation5 + $0x8] sm:$0xff]
    %vm42 = vcmp.lt.u32.totalorder %v40, 2147483648
    %vm43 = vcmp.lt.u32.totalorder %v41, 2147483648
    %v44 = vld [vmem:[#allocation2] sm:$0xff]
    %v45 = vld [vmem:[#allocation2 + $0x8] sm:$0xff]
    %v46 = vmul.f32 %v44, 2.0
    %v47 = vmul.f32 %v45, 2.0
    %v48 = vsel %vm42, %v46, 0.0
    %v49 = vsel %vm43, %v47, 0.0
    %50 = vst [vmem:[#allocation7] sm:$0xff] %v48
    %51 = vst [vmem:[#allocation7 + $0x8] sm:$0xff] %v49
    // Predicated region
    $region18: #{tpu_custom_call.1} parent=1 // pred_check
      _
    $region19: #{tpu_custom_call.1} parent=1 // pred_check_branch
      %53 = sbr.rel (0) target = $region21
    $region20: #{tpu_custom_call.1} parent=1 // pred_region
      %s55 = ssub.s32 256, 256
      %56 = vsyncadd [#allocation4], %s55
      %s57 = sshll.u32 [#allocation7], 4
      %s58 = int_to_ptr.vmem [resolvable:$true] %s57
      %63 = dma.vmem_to_hbm [thread:$0]  %s58, 256, %s2, [#allocation4], 128, 128, 8
    $region21: #{tpu_custom_call.1} parent=1 // pred_fallthru
      _
    // Predicated region
    $region22: #{tpu_custom_call.1} parent=1 // pred_check
      _
    $region23: #{tpu_custom_call.1} parent=1 // pred_check_branch
      %65 = sbr.rel (0) target = $region25
    $region24: #{tpu_custom_call.1} parent=1 // pred_region
      %66 = dma.done [#allocation4], 256
    $region25: #{tpu_custom_call.1} parent=1 // pred_fallthru
      _
    %67 = vsyncpa [#allocation3], 1
    %68 = vsyncpa [#allocation6], 1
    %69 = vsyncpa [#allocation4], 1

</llo_original>
